<compile_context>
chip_gen: v7x
topology: tpu7x:2x2x1
jax: 0.10.0
libtpu: 0.0.40
codegen_flags: <defaults>
</compile_context>

<pallas_src>
import functools

import jax
import jax.numpy as jnp
from jax.experimental import pallas as pl
from jax.experimental.pallas import tpu as pltpu


# -----------------------------------------------------------------------------
# helpers
# -----------------------------------------------------------------------------
def _round_up(n, m):
    return -(-n // m) * m


def _largest_aligned_divisor(n, align, cap):
    """Largest d <= cap with d % align == 0 and n % d == 0 (n multiple of align)."""
    best = align
    d = align
    limit = min(n, cap)
    while d <= limit:
        if n % d == 0:
            best = d
        d += align
    return best


# -----------------------------------------------------------------------------
# Kernel 1: tiled global average pooling over rows.
#   x2d: [R_pad, S_pad] -> mean over the true S lanes -> [R_pad, 1]
#   grid = (R_pad/tr, S_pad/ts); S axis last / "arbitrary", rows "parallel".
# -----------------------------------------------------------------------------
def _pool_kernel(x_ref, o_ref, acc_ref, *, inv_s):
    s = pl.program_id(1)

    @pl.when(s == 0)
    def _():
        acc_ref[...] = jnp.zeros_like(acc_ref)

    # lane-dense reduction over the (large) last axis.
    acc_ref[...] += jnp.sum(x_ref[...], axis=-1, keepdims=True)

    @pl.when(s == pl.num_programs(1) - 1)
    def _():
        o_ref[...] = acc_ref[...] * inv_s


def global_avg_pool_rows(x2d, true_s, *, max_ts=8192, target_block_bytes=8 << 20):
    """x2d: [R, S] f32 -> [R_pad, 1] f32 row-means (over the true_s valid lanes)."""
    R, S = x2d.shape
    R_pad = _round_up(R, 8)

    # Row tile: sublane-aligned; keep >= 2 row blocks when possible so the
    # "parallel" grid axis can shard across both v7x TensorCores.
    if R_pad >= 16:
        row_cap = min(512, max(8, (R_pad // 2) // 8 * 8))
    else:
        row_cap = R_pad
    tr = _largest_aligned_divisor(R_pad, 8, row_cap)

    # Lane tile: as large as possible within the per-block byte budget.
    ts_cap = max(128, min(max_ts, (target_block_bytes // (tr * 4)) // 128 * 128))
    s_128 = _round_up(S, 128)
    if s_128 <= ts_cap:
        ts = s_128
    else:
        ts = _largest_aligned_divisor(s_128, 128, ts_cap)
        if ts < ts_cap // 2:   # awkward S: prefer a zero-padded tail over many
            ts = ts_cap        # tiny reduction steps.
    S_pad = _round_up(S, ts)

    if (R_pad != R) or (S_pad != S):
        x2d = jnp.pad(x2d, ((0, R_pad - R), (0, S_pad - S)))

    # Generation-aware scoped VMEM: declare the true footprint (double-buffered
    # input block + output + scratch + headroom), capped by the chip's VMEM.
    try:
        vmem_cap = pltpu.get_tpu_info().vmem_capacity_bytes
    except Exception:                              # conservative fallback
        vmem_cap = 64 << 20
    need = 2 * tr * ts * 4 + 2 * tr * 4 + tr * 4 + (2 << 20)
    vmem_limit = int(min(max(need, 8 << 20), (vmem_cap * 3) // 4))

    kernel = functools.partial(_pool_kernel, inv_s=1.0 / float(true_s))
    return pl.pallas_call(
        kernel,
        out_shape=jax.ShapeDtypeStruct((R_pad, 1), jnp.float32),
        grid=(R_pad // tr, S_pad // ts),
        in_specs=[pl.BlockSpec((tr, ts), lambda r, s: (r, s))],
        out_specs=pl.BlockSpec((tr, 1), lambda r, s: (r, 0)),
        scratch_shapes=[pltpu.VMEM((tr, 1), jnp.float32)],
        compiler_params=pltpu.CompilerParams(
            dimension_semantics=("parallel", "arbitrary"),
            vmem_limit_bytes=vmem_limit,
        ),
    )(x2d)


# -----------------------------------------------------------------------------
# Kernel 2: fused MLP head.
#   pooled_lb : [L*B, C] clip-major pooled features.
#   base Linear+ReLU once over L*B rows -> static-slice pair gather ->
#   fc7 (concat == two half-matmuls) -> relu -> dropout(eval)=identity ->
#   fc8 as ONE matmul on the batch-major [B, P*512] activation.
#   Everything stays in VMEM; single pallas_call, no grid.
# -----------------------------------------------------------------------------
def _head_kernel(pooled_ref, wb_ref, bb_ref, w7a_ref, w7b_ref, b7_ref,
                 w8_ref, b8_ref, o_ref, *, B, pairs):
    # synthetic base-network tail: Linear(C -> F) + ReLU, once over all rows.
    feats = jnp.maximum(
        jnp.dot(pooled_ref[...], wb_ref[...], preferred_element_type=jnp.float32)
        + bb_ref[...], 0.0)                                           # [L*B, F]

    # fc7 per pair via the concat -> two-half-matmul identity; the pair gather
    # is free static slicing because rows are clip-major.
    pfs = []
    for (i, j) in pairs:
        fi = feats[i * B:(i + 1) * B, :]
        fj = feats[j * B:(j + 1) * B, :]
        pfs.append(jnp.maximum(
            jnp.dot(fi, w7a_ref[...], preferred_element_type=jnp.float32)
            + jnp.dot(fj, w7b_ref[...], preferred_element_type=jnp.float32)
            + b7_ref[...], 0.0))                                      # [B, 512]

    # dropout (eval mode): identity.
    # fc8: single matmul over the batch-major, lane-concatenated activation.
    pf_all = jnp.concatenate(pfs, axis=1)                             # [B, P*512]
    o_ref[...] = (jnp.dot(pf_all, w8_ref[...], preferred_element_type=jnp.float32)
                  + b8_ref[...])


def fused_head(pooled_lb, w_base, b_base, w7a, w7b, b7, w8, b8, *, B, pairs):
    CN = w8.shape[1]
    kernel = functools.partial(_head_kernel, B=B, pairs=tuple(pairs))
    return pl.pallas_call(
        kernel,
        out_shape=jax.ShapeDtypeStruct((B, CN), jnp.float32),
    )(pooled_lb, w_base, b_base, w7a, w7b, b7, w8, b8)


# -----------------------------------------------------------------------------
# Full forward (rotation_sorting branch)
# -----------------------------------------------------------------------------
def rs_network_forward(x, params, tuple_len, *, max_ts=8192,
                       target_block_bytes=8 << 20):
    """x: [B, tuple_len, C, T, H, W] float32 -> logits [B, class_num]."""
    B, L, C, T, H, W = x.shape
    assert L == tuple_len
    Wb, bb = params["w_base"], params["b_base"]            # [C, F], [1, F]
    W7, b7 = params["w_fc7"], params["b_fc7"]              # [2F, 512], [1, 512]
    W8, b8 = params["w_fc8"], params["b_fc8"]              # [P*512, CN], [1, CN]
    F = Wb.shape[1]
    S = T * H * W
    R = B * L * C

    # pooling: contiguous reshape only; 2D [R, S] packs rows densely on the
    # sublanes (no C<8 padding) and keeps the big S axis lane-dense.
    x2d = x.reshape(R, S)
    pooled_flat = global_avg_pool_rows(
        x2d, S, max_ts=max_ts, target_block_bytes=target_block_bytes)  # [R_pad,1]

    # tiny XLA glue (a few hundred bytes): drop row padding and go clip-major
    # so the head kernel can pair-gather with contiguous static slices.
    pooled = pooled_flat[:R, 0].reshape(B, L, C)
    pooled_lb = pooled.transpose(1, 0, 2).reshape(L * B, C)            # row = l*B+b

    pairs = [(i, j) for i in range(L) for j in range(i + 1, L)]
    w7a, w7b = W7[:F, :], W7[F:, :]
    return fused_head(pooled_lb, Wb, bb, w7a, w7b, b7, W8, b8, B=B, pairs=pairs)


# -----------------------------------------------------------------------------
# Pure-JAX reference (mirrors the PyTorch forward exactly)
# -----------------------------------------------------------------------------
def ref_forward(x, params, tuple_len):
    B, L, C, T, H, W = x.shape
    Wb, bb = params["w_base"], params["b_base"]
    W7, b7 = params["w_fc7"], params["b_fc7"]
    W8, b8 = params["w_fc8"], params["b_fc8"]
    feats = []
    for i in range(L):
        clip = x[:, i]                                      # [B, C, T, H, W]
        pooled = clip.mean(axis=(2, 3, 4))                  # [B, C]
        feats.append(jnp.maximum(pooled @ Wb + bb[0], 0.0))
    pf = []
    for i in range(L):
        for j in range(i + 1, L):
            cat = jnp.concatenate([feats[i], feats[j]], axis=1)
            pf.append(jnp.maximum(cat @ W7 + b7[0], 0.0))
    h = jnp.concatenate(pf, axis=1)                         # dropout = identity (eval)
    return h @ W8 + b8[0]


# -----------------------------------------------------------------------------
if __name__ == "__main__":
    def make_case(key, B, L, C, T, H, W, F, class_num):
        hidden = 512                                        # hardcoded in RSNetwork.fc7
        P = L * (L - 1) // 2
        ks = jax.random.split(key, 7)
        scale = 0.05
        params = {
            "w_base": scale * jax.random.normal(ks[0], (C, F), jnp.float32),
            "b_base": scale * jax.random.normal(ks[1], (1, F), jnp.float32),
            "w_fc7":  scale * jax.random.normal(ks[2], (2 * F, hidden), jnp.float32),
            "b_fc7":  scale * jax.random.normal(ks[3], (1, hidden), jnp.float32),
            "w_fc8":  scale * jax.random.normal(ks[4], (hidden * P, class_num), jnp.float32),
            "b_fc8":  scale * jax.random.normal(ks[5], (1, class_num), jnp.float32),
        }
        x = jax.random.normal(ks[6], (B, L, C, T, H, W), jnp.float32)
        return x, params

    key = jax.random.PRNGKey(0)
    k1, k2 = jax.random.split(key)

    # Case 1: aligned shapes (S = 4*32*32 = 4096), default single-step reduction.
    x1, p1 = make_case(k1, B=2, L=3, C=4, T=4, H=32, W=32, F=32, class_num=4)
    out1 = jax.block_until_ready(rs_network_forward(x1, p1, 3))
    ref1 = ref_forward(x1, p1, 3)
    assert out1.shape == (2, 4)
    assert jnp.allclose(out1, ref1, rtol=1e-3, atol=1e-3), "case1 mismatch"

    # Case 1b: same input, force a multi-step reduction (max_ts=512 -> 8 S steps).
    out1b = jax.block_until_ready(rs_network_forward(x1, p1, 3, max_ts=512))
    assert jnp.allclose(out1b, ref1, rtol=1e-3, atol=1e-3), "case1b mismatch"

    # Case 2: unaligned rows (B*L*C = 12) and S (= 300) -> exercises padding.
    x2, p2 = make_case(k2, B=1, L=4, C=3, T=3, H=10, W=10, F=16, class_num=5)
    out2 = jax.block_until_ready(rs_network_forward(x2, p2, 4))
    ref2 = ref_forward(x2, p2, 4)
    assert out2.shape == (1, 5)
    assert jnp.allclose(out2, ref2, rtol=1e-3, atol=1e-3), "case2 mismatch"

    print("KERNEL_OK")
</pallas_src>

<mosaic_0001>
module attributes {stable_mosaic.version = 11 : i64} {
  func.func @_pool_kernel(%arg0: i32, %arg1: i32, %arg2: memref<8x4096xf32, #tpu.memory_space<vmem>>, %arg3: memref<8x1xf32, #tpu.memory_space<vmem>>, %arg4: memref<8x1xf32, #tpu.memory_space<vmem>>) attributes {dimension_semantics = [#tpu.dimension_semantics<parallel>, #tpu.dimension_semantics<arbitrary>], iteration_bounds = array<i64: 3, 1>, scalar_prefetch = 0 : i64, scratch_operands = 1 : i64, tpu.core_type = #tpu.core_type<tc>, window_params = [{transform_indices = @transform_0, window_bounds = array<i64: 8, 4096>}, {transform_indices = @transform_1, window_bounds = array<i64: 8, 1>}]} {
    %c0_i32 = arith.constant 0 : i32
    %0 = arith.cmpi eq, %arg1, %c0_i32 : i32
    %1 = arith.extui %0 : i1 to i32
    %c0_i32_0 = arith.constant 0 : i32
    %2 = arith.cmpi ne, %1, %c0_i32_0 : i32
    scf.if %2 {
      %cst_8 = arith.constant 0.000000e+00 : f32
      %12 = vector.broadcast %cst_8 : f32 to vector<8x1xf32>
      %c0_9 = arith.constant 0 : index
      %c0_10 = arith.constant 0 : index
      %13 = vector.load %arg4[%c0_9, %c0_10] : memref<8x1xf32, #tpu.memory_space<vmem>>, vector<8x1xf32>
      tpu.vector_store %arg4[%c0_9, %c0_10], %12 {strides = array<i32>} : memref<8x1xf32, #tpu.memory_space<vmem>>, vector<8x1xf32>,
    } else {
    }
    %c0 = arith.constant 0 : index
    %c0_1 = arith.constant 0 : index
    %3 = vector.load %arg4[%c0, %c0_1] : memref<8x1xf32, #tpu.memory_space<vmem>>, vector<8x1xf32>
    %c0_2 = arith.constant 0 : index
    %c0_3 = arith.constant 0 : index
    %4 = vector.load %arg2[%c0_2, %c0_3] : memref<8x4096xf32, #tpu.memory_space<vmem>>, vector<8x4096xf32>
    %cst = arith.constant dense<0.000000e+00> : vector<8xf32>
    %5 = vector.multi_reduction <add>, %4, %cst [1] : vector<8x4096xf32> to vector<8xf32>
    %6 = vector.shape_cast %5 : vector<8xf32> to vector<8x1xf32>
    %7 = arith.addf %3, %6 : vector<8x1xf32>
    %c0_4 = arith.constant 0 : index
    %c0_5 = arith.constant 0 : index
    %8 = vector.load %arg4[%c0_4, %c0_5] : memref<8x1xf32, #tpu.memory_space<vmem>>, vector<8x1xf32>
    tpu.vector_store %arg4[%c0_4, %c0_5], %7 {strides = array<i32>} : memref<8x1xf32, #tpu.memory_space<vmem>>, vector<8x1xf32>,
    %c0_i32_6 = arith.constant 0 : i32
    %9 = arith.cmpi eq, %arg1, %c0_i32_6 : i32
    %10 = arith.extui %9 : i1 to i32
    %c0_i32_7 = arith.constant 0 : i32
    %11 = arith.cmpi ne, %10, %c0_i32_7 : i32
    scf.if %11 {
      %c0_8 = arith.constant 0 : index
      %c0_9 = arith.constant 0 : index
      %12 = vector.load %arg4[%c0_8, %c0_9] : memref<8x1xf32, #tpu.memory_space<vmem>>, vector<8x1xf32>
      %cst_10 = arith.constant 2.44140625E-4 : f32
      %13 = vector.broadcast %cst_10 : f32 to vector<8x1xf32>
      %14 = arith.mulf %12, %13 : vector<8x1xf32>
      %c0_11 = arith.constant 0 : index
      %c0_12 = arith.constant 0 : index
      %15 = vector.load %arg3[%c0_11, %c0_12] : memref<8x1xf32, #tpu.memory_space<vmem>>, vector<8x1xf32>
      tpu.vector_store %arg3[%c0_11, %c0_12], %14 {strides = array<i32>} : memref<8x1xf32, #tpu.memory_space<vmem>>, vector<8x1xf32>,
    } else {
    }
    return
  }
  func.func @transform_0(%arg0: i32, %arg1: i32) -> (i32, i32) {
    %c0_i32 = arith.constant 0 : i32
    return %arg0, %arg1 : i32, i32
  }
  func.func @transform_1(%arg0: i32, %arg1: i32) -> (i32, i32) {
    %c0_i32 = arith.constant 0 : i32
    %c0_i32_0 = arith.constant 0 : i32
    return %arg0, %c0_i32 : i32, i32
  }
}

</mosaic_0001>

<llo_original>
// kernel: tpu_custom_call.1
$region0: #{tpu_custom_call.1}
  #allocation0 [shape = 'u32[]', space=smem, size = 0x4, offset = 0x4, fixed_abs, tag = 'smem constant byte address 0x4 - core index']
  #allocation1 [shape = 'u32[144,128]{1,0:T(1,128)}', space=vmem, size = 0x12000, scoped, tag = 'internal scratch']
  #allocation2 [shape = 'f32[8,1]{1,0:T(8,128)}', space=vmem, size = 0x1000, scoped, tag = 'scratch operand']
  %s0 = inlined_call_operand.hbm [shape: f32[24,4096], index: 0, kind: input, shape index: {}]
  %s1 = inlined_call_operand.vmem [shape: f32[24,1], index: 1, kind: output, shape index: {}]
  %s2 = sld [smem:[#allocation0]]
  $region49: #{tpu_custom_call.1} parent=0
    _
  %s4 = ssub.s32 1, %s2
  %s5 = scalar_select 0, %s4, %s2
  $region1: #{tpu_custom_call.1} parent=0
    #allocation3 [shape = 'u8[262144]{0}', space=vmem, size = 0x40000, scoped, tag = 'input window, operand 0']
    #allocation4 [shape = 's32[2]{0}', space=sflag, size = 0x8, scoped, tag = 'scoped memory for tpu_custom_call.1']
    %6 = vsyncpa [#allocation4], 0
    %s7 = scalar_lea.sflag [#allocation4], 1
    %8 = vsyncpa %s7, 0
    loop: start=0, step=1, limit=5
    $region2: #{tpu_custom_call.1} parent=1 // loop_pre_header
      _
    $region3: #{tpu_custom_call.1} parent=1 // loop_header
      %s10 = sphi 0, %s14
      %p11 = scmp.ge.s32.totalorder %s10, 5
      %s17 = sphi 0, %s29
      %s18 = sphi 0, %s25
      %s19 = sphi 0, %s17
      %s20 = sphi 0, %s18
      %s21 = sphi 0, %s19
      %s22 = sphi 0, %s20
      %s34 = sphi 0, %s36
      %s37 = sphi 0, %s34
      %s38 = sphi 0, %s37
      %s54 = sphi 0, %s38
      %s60 = sphi 0, %s62
      %s63 = sphi 0, %s60
      %s64 = sphi 0, %s63
      %s80 = sphi 0, %s64
    $region4: #{tpu_custom_call.1} parent=1 // loop_header_branch
      %13 = sbr.rel (%p11) target = $region8
    $region5: #{tpu_custom_call.1} parent=1 // loop_body
      %s15 = ssub.s32 %s10, 1
      %s16 = ssub.s32 %s10, 2
      %s23 = sadd.s32 1, %s18
      %p24 = scmp.ge.s32.totalorder %s23, 1
      %s25 = scalar_select %p24, 0, %s23
      %s26 = sadd.s32 1, %s17
      %s27 = scalar_select %p24, %s26, %s17
      %p28 = scmp.ge.s32.totalorder %s27, 3
      %s29 = scalar_select %p28, 0, %s27
      %s30 = ssub.s32 %s17, %s29
      %s31 = ssub.s32 %s18, %s25
      %s32 = sor.u32 %s30, %s31
      %p33 = scmp.eq.s32.totalorder %s32, 0
      %s35 = sadd.s32 %s34, 1
      %s36 = scalar_select %p33, %s34, %s35
      %p39 = pneg %p33
      %p40 = scmp.eq.s32.totalorder %s10, 2
      %p41 = por %p39, %p40
      %p42 = scmp.ne.s32.totalorder %s34, %s37
      %p43 = scmp.eq.s32.totalorder %s10, 0
      %p44 = por %p42, %p43
      %p45 = scmp.ne.s32.totalorder %s34, %s37
      %p46 = scmp.eq.s32.totalorder %s15, 2
      %p47 = por %p45, %p46
      %p48 = scmp.ne.s32.totalorder %s37, %s38
      %p49 = scmp.eq.s32.totalorder %s15, 0
      %p50 = por %p48, %p49
      %p51 = scmp.ne.s32.totalorder %s37, %s38
      %p52 = scmp.eq.s32.totalorder %s16, 2
      %p53 = por %p51, %p52
      %p55 = scmp.ne.s32.totalorder %s38, %s54
      %p56 = scmp.eq.s32.totalorder %s16, 0
      %p57 = por %p55, %p56
      %s58 = ssub.s32 %s17, %s29
      %p59 = scmp.eq.s32.totalorder %s58, 0
      %s61 = sadd.s32 %s60, 1
      %s62 = scalar_select %p59, %s60, %s61
      %p65 = pneg %p59
      %p66 = scmp.eq.s32.totalorder %s10, 2
      %p67 = por %p65, %p66
      %p68 = scmp.ne.s32.totalorder %s60, %s63
      %p69 = scmp.eq.s32.totalorder %s10, 0
      %p70 = por %p68, %p69
      %p71 = scmp.ne.s32.totalorder %s60, %s63
      %p72 = scmp.eq.s32.totalorder %s15, 2
      %p73 = por %p71, %p72
      %p74 = scmp.ne.s32.totalorder %s63, %s64
      %p75 = scmp.eq.s32.totalorder %s15, 0
      %p76 = por %p74, %p75
      %p77 = scmp.ne.s32.totalorder %s63, %s64
      %p78 = scmp.eq.s32.totalorder %s16, 2
      %p79 = por %p77, %p78
      %p81 = scmp.ne.s32.totalorder %s64, %s80
      %p82 = scmp.eq.s32.totalorder %s16, 0
      %p83 = por %p81, %p82
      %p84 = scmp.le.s32.totalorder 1, %s10
      %p85 = scmp.lt.s32.totalorder %s10, 4
      %p86 = pnand %p84, %p85
      %p87 = pneg %p86
      // Predicated region
      $region9: #{tpu_custom_call.1} parent=5 // pred_check
        _
      $region10: #{tpu_custom_call.1} parent=5 // pred_check_branch
        %89 = sbr.rel (%p86) target = $region12
      $region11: #{tpu_custom_call.1} parent=5 // pred_region
        %s90 = ssub.s32 %s10, 1
      $region12: #{tpu_custom_call.1} parent=5 // pred_fallthru
        _
      %p91 = scmp.lt.s32.totalorder %s10, 3
      // Predicated region
      $region13: #{tpu_custom_call.1} parent=5 // pred_check
        %p92 = pneg %p91
      $region14: #{tpu_custom_call.1} parent=5 // pred_check_branch
        %94 = sbr.rel (%p92) target = $region16
      $region15: #{tpu_custom_call.1} parent=5 // pred_region
        // Predicated region
        $region17: #{tpu_custom_call.1} parent=15 // pred_check
          %p95 = pneg %p44
        $region18: #{tpu_custom_call.1} parent=15 // pred_check_branch
          %97 = sbr.rel (%p95) target = $region20
        $region19: #{tpu_custom_call.1} parent=15 // pred_region
          %s98 = sand.u32 %s34, 1
          %s99 = scalar_lea.sflag [#allocation4], %s98
          %s100 = sand.u32 %s34, 1
          %s101 = smul.addr %s100, 256
          %s102 = scalar_lea.vmem [#allocation3], %s101
          %s103 = smul.u32 32, %s18
          %s105 = ssub.s32 4096, 4096
          %106 = vsyncadd %s99, %s105
          %s107 = smul.addr %s17, 32
          %s108 = sadd.s32 %s103, %s107
          %s109 = smul.addr %s108, 128
          %s110 = scalar_lea.hbm %s0, %s109
          %s112 = sshll.u32 %s102, 4
          %s113 = int_to_ptr.vmem [resolvable:$true] %s112
          %115 = dma.hbm_to_vmem [thread:$0]  %s110, 4096, %s113, %s99
        $region20: #{tpu_custom_call.1} parent=15 // pred_fallthru
          _
      $region16: #{tpu_custom_call.1} parent=5 // pred_fallthru
        _
      %p116 = scmp.le.s32.totalorder 1, %s10
      %p117 = scmp.lt.s32.totalorder %s10, 4
      %p118 = pnand %p116, %p117
      %p119 = pneg %p118
      // Predicated region
      $region21: #{tpu_custom_call.1} parent=5 // pred_check
        _
      $region22: #{tpu_custom_call.1} parent=5 // pred_check_branch
        %121 = sbr.rel (%p118) target = $region24
      $region23: #{tpu_custom_call.1} parent=5 // pred_region
        %s122 = ssub.s32 %s10, 1
        %s123 = sand.u32 %s37, 1
        %s124 = scalar_lea.sflag [#allocation4], %s123
        %s125 = sand.u32 %s37, 1
        %s126 = smul.addr %s125, 256
        %s127 = scalar_lea.vmem [#allocation3], %s126
        // Predicated region
        $region25: #{tpu_custom_call.1} parent=23 // pred_check
          %p128 = pneg %p50
        $region26: #{tpu_custom_call.1} parent=23 // pred_check_branch
          %130 = sbr.rel (%p128) target = $region28
        $region27: #{tpu_custom_call.1} parent=23 // pred_region
          %131 = dma.done %s124, 4096
        $region28: #{tpu_custom_call.1} parent=23 // pred_fallthru
          _
        %s132 = sand.u32 %s37, 1
        %s133 = scalar_lea.sflag [#allocation4], %s132
        %s134 = sand.u32 %s37, 1
        %s135 = smul.addr %s134, 256
        %s136 = scalar_lea.vmem [#allocation3], %s135
        %p137 = pneg %p50
        %p138 = pneg %p47
        %p139 = pneg %p76
        %p140 = pneg %p73
        %p141 = scmp.lt.s32.totalorder %s19, 2
        %s142 = scalar_select %p141, %s19, 2
        %s143 = smul.addr %s142, 8
        %s144 = scalar_lea.vmem %s1, %s143
        %s145 = smul.u32 32, %s20
        %p146 = scmp.lt.s32.totalorder %s19, 2
        %s147 = scalar_select %p146, %s19, 2
        %s148 = smul.addr %s147, 8
        %s149 = scalar_lea.vmem %s1, %s148
        %p150 = scmp.eq.s32.totalorder %s20, 0
        // Predicated region
        $region29: #{tpu_custom_call.1} parent=23 // pred_check
          %p151 = pneg %p150
        $region30: #{tpu_custom_call.1} parent=23 // pred_check_branch
          %153 = sbr.rel (%p151) target = $region32
        $region31: #{tpu_custom_call.1} parent=23 // pred_region
          %vm154 = vcmask 7168
          %155 = vst.msk [vmem:[#allocation2] sm:$0xff] %vm154, 0.0
        $region32: #{tpu_custom_call.1} parent=23 // pred_fallthru
          _
        %v156 = vld [vmem:[#allocation2] sm:$0xff]
        %v157 = vld [vmem:[%s127] sm:$0xff]
        %v158 = vld [vmem:[%s127 + $0x8] sm:$0xff]
        %v159 = vld [vmem:[%s127 + $0x10] sm:$0xff]
        %v160 = vld [vmem:[%s127 + $0x18] sm:$0xff]
        %v161 = vld [vmem:[%s127 + $0x20] sm:$0xff]
        %v162 = vld [vmem:[%s127 + $0x28] sm:$0xff]
        %v163 = vld [vmem:[%s127 + $0x30] sm:$0xff]
        %v164 = vld [vmem:[%s127 + $0x38] sm:$0xff]
        %v165 = vld [vmem:[%s127 + $0x40] sm:$0xff]
        %v166 = vld [vmem:[%s127 + $0x48] sm:$0xff]
        %v167 = vld [vmem:[%s127 + $0x50] sm:$0xff]
        %v168 = vld [vmem:[%s127 + $0x58] sm:$0xff]
        %v169 = vld [vmem:[%s127 + $0x60] sm:$0xff]
        %v170 = vld [vmem:[%s127 + $0x68] sm:$0xff]
        %v171 = vld [vmem:[%s127 + $0x70] sm:$0xff]
        %v172 = vld [vmem:[%s127 + $0x78] sm:$0xff]
        %v173 = vld [vmem:[%s127 + $0x80] sm:$0xff]
        %v174 = vld [vmem:[%s127 + $0x88] sm:$0xff]
        %v175 = vld [vmem:[%s127 + $0x90] sm:$0xff]
        %v176 = vld [vmem:[%s127 + $0x98] sm:$0xff]
        %v177 = vld [vmem:[%s127 + $0xa0] sm:$0xff]
        %v178 = vld [vmem:[%s127 + $0xa8] sm:$0xff]
        %v179 = vld [vmem:[%s127 + $0xb0] sm:$0xff]
        %v180 = vld [vmem:[%s127 + $0xb8] sm:$0xff]
        %v181 = vld [vmem:[%s127 + $0xc0] sm:$0xff]
        %v182 = vld [vmem:[%s127 + $0xc8] sm:$0xff]
        %v183 = vld [vmem:[%s127 + $0xd0] sm:$0xff]
        %v184 = vld [vmem:[%s127 + $0xd8] sm:$0xff]
        %v185 = vld [vmem:[%s127 + $0xe0] sm:$0xff]
        %v186 = vld [vmem:[%s127 + $0xe8] sm:$0xff]
        %v187 = vld [vmem:[%s127 + $0xf0] sm:$0xff]
        %v188 = vld [vmem:[%s127 + $0xf8] sm:$0xff]
        %v189 = vadd.f32 %v157, %v158
        %v190 = vadd.f32 %v189, %v159
        %v191 = vadd.f32 %v190, %v160
        %v192 = vadd.f32 %v191, %v161
        %v193 = vadd.f32 %v192, %v162
        %v194 = vadd.f32 %v193, %v163
        %v195 = vadd.f32 %v194, %v164
        %v196 = vadd.f32 %v195, %v165
        %v197 = vadd.f32 %v196, %v166
        %v198 = vadd.f32 %v197, %v167
        %v199 = vadd.f32 %v198, %v168
        %v200 = vadd.f32 %v199, %v169
        %v201 = vadd.f32 %v200, %v170
        %v202 = vadd.f32 %v201, %v171
        %v203 = vadd.f32 %v202, %v172
        %v204 = vadd.f32 %v203, %v173
        %v205 = vadd.f32 %v204, %v174
        %v206 = vadd.f32 %v205, %v175
        %v207 = vadd.f32 %v206, %v176
        %v208 = vadd.f32 %v207, %v177
        %v209 = vadd.f32 %v208, %v178
        %v210 = vadd.f32 %v209, %v179
        %v211 = vadd.f32 %v210, %v180
        %v212 = vadd.f32 %v211, %v181
        %v213 = vadd.f32 %v212, %v182
        %v214 = vadd.f32 %v213, %v183
        %v215 = vadd.f32 %v214, %v184
        %v216 = vadd.f32 %v215, %v185
        %v217 = vadd.f32 %v216, %v186
        %v218 = vadd.f32 %v217, %v187
        %v219 = vadd.f32 %v218, %v188
        %220 = vadd.xlane.f32.xlu0 %v219
        %v221 = vpop.xlane.xlu0 %220
        %v222 = vadd.f32 %v156, %v221
        %vm223 = vcmask 7168
        %224 = vst.msk [vmem:[#allocation2] sm:$0xff] %vm223, %v222
        // Predicated region
        $region33: #{tpu_custom_call.1} parent=23 // pred_check
          %p225 = pneg %p150
        $region34: #{tpu_custom_call.1} parent=23 // pred_check_branch
          %227 = sbr.rel (%p225) target = $region36
        $region35: #{tpu_custom_call.1} parent=23 // pred_region
          %v228 = vld [vmem:[#allocation2] sm:$0xff]
          %v229 = vmul.f32 %v228, 0.00024414063
          %230 = vst.msk [vmem:[%s149] sm:$0xff] %vm223, %v229
        $region36: #{tpu_custom_call.1} parent=23 // pred_fallthru
          _
        %p231 = scmp.lt.s32.totalorder %s19, 2
        %s232 = scalar_select %p231, %s19, 2
        %s233 = smul.addr %s232, 8
        %s234 = scalar_lea.vmem %s1, %s233
        // Predicated region
        $region37: #{tpu_custom_call.1} parent=23 // pred_check
          %p235 = pneg %p73
        $region38: #{tpu_custom_call.1} parent=23 // pred_check_branch
          %237 = sbr.rel (%p235) target = $region40
        $region39: #{tpu_custom_call.1} parent=23 // pred_region
          _
        $region40: #{tpu_custom_call.1} parent=23 // pred_fallthru
          _
      $region24: #{tpu_custom_call.1} parent=5 // pred_fallthru
        _
      %p238 = scmp.le.s32.totalorder 2, %s10
      // Predicated region
      $region41: #{tpu_custom_call.1} parent=5 // pred_check
        %p239 = pneg %p238
      $region42: #{tpu_custom_call.1} parent=5 // pred_check_branch
        %241 = sbr.rel (%p239) target = $region44
      $region43: #{tpu_custom_call.1} parent=5 // pred_region
        %s242 = ssub.s32 %s10, 2
        // Predicated region
        $region45: #{tpu_custom_call.1} parent=43 // pred_check
          %p243 = pneg %p79
        $region46: #{tpu_custom_call.1} parent=43 // pred_check_branch
          %245 = sbr.rel (%p243) target = $region48
        $region47: #{tpu_custom_call.1} parent=43 // pred_region
          %p246 = scmp.lt.s32.totalorder %s21, 2
          %s247 = scalar_select %p246, %s21, 2
          %s248 = smul.addr %s247, 8
          %s249 = scalar_lea.vmem %s1, %s248
        $region48: #{tpu_custom_call.1} parent=43 // pred_fallthru
          _
      $region44: #{tpu_custom_call.1} parent=5 // pred_fallthru
        _
    $region6: #{tpu_custom_call.1} parent=1 // loop_footer
      %s14 = sadd.s32 1, %s10
    $region7: #{tpu_custom_call.1} parent=1 // loop_footer_branch
      %9 = sbr.rel target = $region3
    $region8: #{tpu_custom_call.1} parent=1 // loop_exit
      _
    %250 = vsyncpa [#allocation4], 1
    %s251 = scalar_lea.sflag [#allocation4], 1
    %252 = vsyncpa %s251, 1

</llo_original>
